<compile_context>
chip_gen: v7x
topology: tpu7x:2x2x1
jax: 0.10.0
libtpu: 0.0.40
codegen_flags: <defaults>
</compile_context>

<pallas_src>
import functools

import jax
import jax.numpy as jnp
from jax.experimental import pallas as pl
from jax.experimental.pallas import tpu as pltpu


# ---------------------------------------------------------------------------
# Kernel
# ---------------------------------------------------------------------------
def _kd_kl_kernel(pred_ref, soft_ref, out_ref, *, inv_T: float, scale: float):
    pred = pred_ref[...].astype(jnp.float32) * inv_T
    soft = soft_ref[...].astype(jnp.float32) * inv_T

    # Numerically stable shifted logits.
    s_shift = soft - jnp.max(soft, axis=-1, keepdims=True)
    p_shift = pred - jnp.max(pred, axis=-1, keepdims=True)

    s_exp = jnp.exp(s_shift)  # EUP
    p_exp = jnp.exp(p_shift)  # EUP

    s_sum = jnp.sum(s_exp, axis=-1, keepdims=True)  # (bn, 1)
    p_sum = jnp.sum(p_exp, axis=-1, keepdims=True)  # (bn, 1)

    # sum_c target*(log_target - log_pred)
    #   = sum_c s_exp*(s_shift - p_shift)/s_sum - log(s_sum) + log(p_sum)
    num = jnp.sum(s_exp * (s_shift - p_shift), axis=-1, keepdims=True)

    # One exact divide per row (approx reciprocal not worth the precision hit).
    row_kl = num / s_sum - jnp.log(s_sum) + jnp.log(p_sum)

    # scale = T*T / C folds the class-mean and the temperature factor.
    out_ref[...] = (row_kl * scale).astype(out_ref.dtype)


# ---------------------------------------------------------------------------
# Tiling policy
# ---------------------------------------------------------------------------
_ROW_ALIGN = 32                  # sublane-safe for f32 / bf16 / int8 inputs
_F32_TMP_COUNT = 6               # peak live (bn, C) f32 temporaries in the body
_MIN_PALLAS_ELEMS = 65536        # below this, pallas_call overhead dominates
_DEFAULT_VMEM_CAP = 64 << 20     # conservative v7x per-TC value if query fails


def _round_up(x: int, m: int) -> int:
    return ((x + m - 1) // m) * m


def _vmem_capacity_bytes() -> int:
    """Generation-aware VMEM capacity (128 MiB v5e/v6e, 64 MiB/TC v7x)."""
    try:
        info = pltpu.get_tpu_info()
        cap = int(getattr(info, "vmem_capacity_bytes", 0) or 0)
        if cap > 0:
            return cap
    except Exception:
        pass
    return _DEFAULT_VMEM_CAP


def _choose_block_n(N: int, C: int, itemsize: int, vmem_cap: int) -> int:
    """Row-tile size; 0 means 'does not fit, fall back to pure JAX'."""
    # Per-row VMEM footprint: 2 inputs x 2 pipeline buffers at NATIVE width
    # plus the fp32 intermediates the kernel body materializes.
    per_row = 2 * 2 * C * itemsize + _F32_TMP_COUNT * C * 4
    budget = int(vmem_cap * 0.55)          # headroom for Mosaic internals
    bn = (budget // per_row) // _ROW_ALIGN * _ROW_ALIGN
    if bn < _ROW_ALIGN:
        return 0

    max_bn = 2048 if C <= 512 else 1024    # keep per-step DMAs >= ~1 MiB
    bn = min(bn, max_bn)

    # Grid-step target: >= 2 steps per TensorCore on v7x (>= 4 total) for
    # large N, >= 2 total for mid N, a single full-extent block for tiny N.
    if N >= 1024:
        tgt = _round_up(pl.cdiv(N, 4), _ROW_ALIGN)
    elif N > 2 * _ROW_ALIGN:
        tgt = _round_up(pl.cdiv(N, 2), _ROW_ALIGN)
    else:
        tgt = N                            # full first dim -> alignment waived
    bn = min(bn, tgt, _round_up(N, _ROW_ALIGN))
    return max(bn, 1)


# ---------------------------------------------------------------------------
# Reference / fallback path
# ---------------------------------------------------------------------------
def _kd_kl_per_row_ref(pred, soft_label, T: float):
    """Pure-JAX reference / fallback path (same math, XLA-fused)."""
    pred = pred.astype(jnp.float32) / T
    soft = soft_label.astype(jnp.float32) / T
    target = jax.nn.softmax(soft, axis=1)
    log_t = jax.nn.log_softmax(soft, axis=1)
    log_p = jax.nn.log_softmax(pred, axis=1)
    kd = target * (log_t - log_p)
    return jnp.mean(kd, axis=1) * (T * T)


# ---------------------------------------------------------------------------
# Wrapper
# ---------------------------------------------------------------------------
def kd_kl_div_per_row(pred: jax.Array, soft_label: jax.Array, T: int,
                      *, use_pallas=None) -> jax.Array:
    """Per-row KD KL loss, shape (N,). Hot path runs in Pallas."""
    assert pred.shape == soft_label.shape and pred.ndim == 2
    N, C = pred.shape
    T = float(T)

    itemsize = jnp.dtype(pred.dtype).itemsize
    vmem_cap = _vmem_capacity_bytes()
    bn = _choose_block_n(N, C, itemsize, vmem_cap)

    if use_pallas is None:
        use_pallas = (N * C) >= _MIN_PALLAS_ELEMS
    if bn == 0:
        # TODO(synk): C-tiled streaming logsumexp kernel for very large C.
        use_pallas = False
    if not use_pallas:
        return _kd_kl_per_row_ref(pred, soft_label, T)

    # No jnp.pad: ragged last block is clipped by Pallas on input DMAs and on
    # the output writeback; garbage tail rows never leave their own rows.
    grid = (pl.cdiv(N, bn),)

    # vmem_limit covers the double-buffered native-width input tiles, the fp32
    # body intermediates and the (tiny) output tile, capped per generation.
    need = (2 * 2 * bn * C * itemsize          # input tiles, double-buffered
            + _F32_TMP_COUNT * bn * C * 4      # fp32 intermediates
            + 2 * bn * 4)                      # output tile, double-buffered
    vmem_limit = int(min(max(32 << 20, int(1.35 * need)), int(0.9 * vmem_cap)))

    out = pl.pallas_call(
        functools.partial(_kd_kl_kernel, inv_T=1.0 / T, scale=T * T / C),
        out_shape=jax.ShapeDtypeStruct((N, 1), jnp.float32),
        grid_spec=pltpu.PrefetchScalarGridSpec(
            num_scalar_prefetch=0,
            grid=grid,
            in_specs=[
                pl.BlockSpec((bn, C), lambda i: (i, 0)),
                pl.BlockSpec((bn, C), lambda i: (i, 0)),
            ],
            out_specs=pl.BlockSpec((bn, 1), lambda i: (i, 0)),
        ),
        compiler_params=pltpu.CompilerParams(
            dimension_semantics=("parallel",),
            vmem_limit_bytes=vmem_limit,
        ),
    )(pred, soft_label)
    return out[:, 0]


# ---------------------------------------------------------------------------
# Module
# ---------------------------------------------------------------------------
class KnowledgeDistillationKLDivLoss:
    """JAX/Pallas port of the PyTorch module (forward only)."""

    def __init__(self, reduction: str = "mean", loss_weight: float = 1.0, T: int = 10):
        assert T >= 1
        assert reduction in ("none", "mean", "sum")
        self.reduction = reduction
        self.loss_weight = loss_weight
        self.T = T

    def __call__(self, pred, soft_label, weight=None, avg_factor=None,
                 reduction_override=None):
        assert reduction_override in (None, "none", "mean", "sum")
        reduction = reduction_override if reduction_override else self.reduction

        loss = kd_kl_div_per_row(pred, soft_label, self.T)  # (N,)

        # weight_reduce_loss (mmdet @weighted_loss decorator semantics)
        if weight is not None:
            loss = loss * weight
        if avg_factor is None:
            if reduction == "mean":
                loss = jnp.mean(loss)
            elif reduction == "sum":
                loss = jnp.sum(loss)
            # 'none': keep per-row
        else:
            if reduction == "mean":
                loss = jnp.sum(loss) / avg_factor
            elif reduction != "none":
                raise ValueError("avg_factor can not be used with reduction='sum'")
        return self.loss_weight * loss


# ---------------------------------------------------------------------------
# Self-test
# ---------------------------------------------------------------------------
if __name__ == "__main__":
    key = jax.random.PRNGKey(0)
    k1, k2, k3, k4, k5, k6 = jax.random.split(key, 6)

    # Case 1: small COCO-ish shape; N NOT a multiple of the row tile so the
    # ragged-last-block (no-pad) path is exercised. Force the Pallas path.
    N1, C1 = 200, 81
    pred1 = jax.random.normal(k1, (N1, C1), jnp.float32) * 3.0
    soft1 = jax.random.normal(k2, (N1, C1), jnp.float32) * 3.0
    row1 = kd_kl_div_per_row(pred1, soft1, 10, use_pallas=True)
    jax.block_until_ready(row1)
    ref1 = _kd_kl_per_row_ref(pred1, soft1, 10.0)
    assert row1.shape == (N1,)
    assert jnp.allclose(row1, ref1, rtol=1e-4, atol=1e-6), (row1, ref1)

    # Case 2: module-level (auto dispatch -> Pallas), multi-step grid with a
    # ragged last block (N=1200 -> bn=320 -> 4 steps, last block 240 rows).
    loss_mod = KnowledgeDistillationKLDivLoss(reduction="mean", loss_weight=1.0, T=10)
    N2, C2 = 1200, 256
    pred2 = jax.random.normal(k3, (N2, C2), jnp.float32) * 3.0
    soft2 = jax.random.normal(k4, (N2, C2), jnp.float32) * 3.0
    loss2 = loss_mod(pred2, soft2)
    jax.block_until_ready(loss2)
    ref2 = jnp.mean(_kd_kl_per_row_ref(pred2, soft2, 10.0))
    assert jnp.allclose(loss2, ref2, rtol=1e-4, atol=1e-6), (loss2, ref2)

    # Case 3: bf16 inputs (exercises native-itemsize tile sizing).
    pred3 = (jax.random.normal(k5, (N2, C2), jnp.float32) * 3.0).astype(jnp.bfloat16)
    soft3 = (jax.random.normal(k6, (N2, C2), jnp.float32) * 3.0).astype(jnp.bfloat16)
    row3 = kd_kl_div_per_row(pred3, soft3, 10, use_pallas=True)
    jax.block_until_ready(row3)
    ref3 = _kd_kl_per_row_ref(pred3, soft3, 10.0)
    assert jnp.allclose(row3, ref3, rtol=1e-4, atol=1e-6), (row3, ref3)

    # Case 4: 'none' reduction + per-row weight path.
    w = jax.random.uniform(k1, (N2,), jnp.float32)
    loss_none = loss_mod(pred2, soft2, weight=w, reduction_override="none")
    jax.block_until_ready(loss_none)
    assert loss_none.shape == (N2,)

    print("KERNEL_OK")
</pallas_src>

<mosaic_0001>
module attributes {stable_mosaic.version = 11 : i64} {
  func.func @_kd_kl_kernel(%arg0: i32, %arg1: memref<128x81xf32, #tpu.memory_space<vmem>>, %arg2: memref<128x81xf32, #tpu.memory_space<vmem>>, %arg3: memref<128x1xf32, #tpu.memory_space<vmem>>) attributes {dimension_semantics = [#tpu.dimension_semantics<parallel>], iteration_bounds = array<i64: 2>, scalar_prefetch = 0 : i64, scratch_operands = 0 : i64, tpu.core_type = #tpu.core_type<tc>, window_params = [{transform_indices = @transform_0, window_bounds = array<i64: 128, 81>}, {transform_indices = @transform_1, window_bounds = array<i64: 128, 81>}, {transform_indices = @transform_2, window_bounds = array<i64: 128, 1>}]} {
    %c0 = arith.constant 0 : index
    %c0_0 = arith.constant 0 : index
    %0 = vector.load %arg1[%c0, %c0_0] : memref<128x81xf32, #tpu.memory_space<vmem>>, vector<128x81xf32>
    %cst = arith.constant 1.000000e-01 : f32
    %1 = vector.broadcast %cst : f32 to vector<128x81xf32>
    %2 = arith.mulf %0, %1 : vector<128x81xf32>
    %c0_1 = arith.constant 0 : index
    %c0_2 = arith.constant 0 : index
    %3 = vector.load %arg2[%c0_1, %c0_2] : memref<128x81xf32, #tpu.memory_space<vmem>>, vector<128x81xf32>
    %cst_3 = arith.constant 1.000000e-01 : f32
    %4 = vector.broadcast %cst_3 : f32 to vector<128x81xf32>
    %5 = arith.mulf %3, %4 : vector<128x81xf32>
    %cst_4 = arith.constant dense<0xFF800000> : vector<128xf32>
    %6 = vector.multi_reduction <maximumf>, %5, %cst_4 [1] : vector<128x81xf32> to vector<128xf32>
    %7 = vector.shape_cast %6 : vector<128xf32> to vector<128x1xf32>
    %8 = vector.broadcast %7 : vector<128x1xf32> to vector<128x81xf32>
    %9 = arith.subf %5, %8 : vector<128x81xf32>
    %cst_5 = arith.constant dense<0xFF800000> : vector<128xf32>
    %10 = vector.multi_reduction <maximumf>, %2, %cst_5 [1] : vector<128x81xf32> to vector<128xf32>
    %11 = vector.shape_cast %10 : vector<128xf32> to vector<128x1xf32>
    %12 = vector.broadcast %11 : vector<128x1xf32> to vector<128x81xf32>
    %13 = arith.subf %2, %12 : vector<128x81xf32>
    %14 = math.exp %9 : vector<128x81xf32>
    %15 = math.exp %13 : vector<128x81xf32>
    %cst_6 = arith.constant dense<0.000000e+00> : vector<128xf32>
    %16 = vector.multi_reduction <add>, %14, %cst_6 [1] : vector<128x81xf32> to vector<128xf32>
    %17 = vector.shape_cast %16 : vector<128xf32> to vector<128x1xf32>
    %cst_7 = arith.constant dense<0.000000e+00> : vector<128xf32>
    %18 = vector.multi_reduction <add>, %15, %cst_7 [1] : vector<128x81xf32> to vector<128xf32>
    %19 = vector.shape_cast %18 : vector<128xf32> to vector<128x1xf32>
    %20 = arith.subf %9, %13 : vector<128x81xf32>
    %21 = arith.mulf %14, %20 : vector<128x81xf32>
    %cst_8 = arith.constant dense<0.000000e+00> : vector<128xf32>
    %22 = vector.multi_reduction <add>, %21, %cst_8 [1] : vector<128x81xf32> to vector<128xf32>
    %23 = vector.shape_cast %22 : vector<128xf32> to vector<128x1xf32>
    %24 = arith.divf %23, %17 : vector<128x1xf32>
    %25 = math.log %17 : vector<128x1xf32>
    %26 = arith.subf %24, %25 : vector<128x1xf32>
    %27 = math.log %19 : vector<128x1xf32>
    %28 = arith.addf %26, %27 : vector<128x1xf32>
    %cst_9 = arith.constant 1.23456788 : f32
    %29 = vector.broadcast %cst_9 : f32 to vector<128x1xf32>
    %30 = arith.mulf %28, %29 : vector<128x1xf32>
    %c0_10 = arith.constant 0 : index
    %c0_11 = arith.constant 0 : index
    %31 = vector.load %arg3[%c0_10, %c0_11] : memref<128x1xf32, #tpu.memory_space<vmem>>, vector<128x1xf32>
    tpu.vector_store %arg3[%c0_10, %c0_11], %30 {strides = array<i32>} : memref<128x1xf32, #tpu.memory_space<vmem>>, vector<128x1xf32>,
    return
  }
  func.func @transform_0(%arg0: i32) -> (i32, i32) {
    %c0_i32 = arith.constant 0 : i32
    %c0_i32_0 = arith.constant 0 : i32
    return %arg0, %c0_i32 : i32, i32
  }
  func.func @transform_1(%arg0: i32) -> (i32, i32) {
    %c0_i32 = arith.constant 0 : i32
    %c0_i32_0 = arith.constant 0 : i32
    return %arg0, %c0_i32 : i32, i32
  }
  func.func @transform_2(%arg0: i32) -> (i32, i32) {
    %c0_i32 = arith.constant 0 : i32
    %c0_i32_0 = arith.constant 0 : i32
    return %arg0, %c0_i32 : i32, i32
  }
}

</mosaic_0001>

<llo_original>
// kernel: tpu_custom_call.1
$region0: #{tpu_custom_call.1}
  #allocation0 [shape = 'u32[]', space=smem, size = 0x4, offset = 0x4, fixed_abs, tag = 'smem constant byte address 0x4 - core index']
  #allocation1 [shape = 'u32[144,128]{1,0:T(1,128)}', space=vmem, size = 0x12000, scoped, tag = 'internal scratch']
  %s0 = inlined_call_operand.vmem [shape: f32[200,81], index: 0, kind: input, shape index: {}]
  %s1 = inlined_call_operand.vmem [shape: f32[200,81], index: 1, kind: input, shape index: {}]
  %s2 = inlined_call_operand.vmem [shape: f32[200,1], index: 2, kind: output, shape index: {}]
  %s3 = sld [smem:[#allocation0]]
  $region89: #{tpu_custom_call.1} parent=0
    _
  %s5 = ssub.s32 1, %s3
  %s6 = scalar_select 0, %s5, %s3
  $region1: #{tpu_custom_call.1} parent=0
    #allocation2 [shape = 'u8[131072]{0}', space=vmem, size = 0x20000, scoped, tag = 'output window, operand 0']
    loop: start=0, step=1, limit=4
    $region2: #{tpu_custom_call.1} parent=1 // loop_pre_header
      _
    $region3: #{tpu_custom_call.1} parent=1 // loop_header
      %s8 = sphi 0, %s12
      %p9 = scmp.ge.s32.totalorder %s8, 4
      %s18 = sphi 0, %s20
      %s21 = sphi 0, %s18
      %s22 = sphi 0, %s21
      %s38 = sphi 0, %s22
      %s44 = sphi 0, %s46
      %s47 = sphi 0, %s44
      %s48 = sphi 0, %s47
      %s64 = sphi 0, %s48
      %s70 = sphi 0, %s72
      %s73 = sphi 0, %s70
      %s74 = sphi 0, %s73
      %s90 = sphi 0, %s74
    $region4: #{tpu_custom_call.1} parent=1 // loop_header_branch
      %11 = sbr.rel (%p9) target = $region8
    $region5: #{tpu_custom_call.1} parent=1 // loop_body
      %s13 = ssub.s32 %s8, 1
      %s14 = ssub.s32 %s8, 2
      %s15 = sadd.s32 %s8, 1
      %s16 = ssub.s32 %s8, %s15
      %p17 = scmp.eq.s32.totalorder %s16, 0
      %s19 = sadd.s32 %s18, 1
      %s20 = scalar_select %p17, %s18, %s19
      %p23 = pneg %p17
      %p24 = scmp.eq.s32.totalorder %s8, 1
      %p25 = por %p23, %p24
      %p26 = scmp.ne.s32.totalorder %s18, %s21
      %p27 = scmp.eq.s32.totalorder %s8, 0
      %p28 = por %p26, %p27
      %p29 = scmp.ne.s32.totalorder %s18, %s21
      %p30 = scmp.eq.s32.totalorder %s13, 1
      %p31 = por %p29, %p30
      %p32 = scmp.ne.s32.totalorder %s21, %s22
      %p33 = scmp.eq.s32.totalorder %s13, 0
      %p34 = por %p32, %p33
      %p35 = scmp.ne.s32.totalorder %s21, %s22
      %p36 = scmp.eq.s32.totalorder %s14, 1
      %p37 = por %p35, %p36
      %p39 = scmp.ne.s32.totalorder %s22, %s38
      %p40 = scmp.eq.s32.totalorder %s14, 0
      %p41 = por %p39, %p40
      %s42 = ssub.s32 %s8, %s15
      %p43 = scmp.eq.s32.totalorder %s42, 0
      %s45 = sadd.s32 %s44, 1
      %s46 = scalar_select %p43, %s44, %s45
      %p49 = pneg %p43
      %p50 = scmp.eq.s32.totalorder %s8, 1
      %p51 = por %p49, %p50
      %p52 = scmp.ne.s32.totalorder %s44, %s47
      %p53 = scmp.eq.s32.totalorder %s8, 0
      %p54 = por %p52, %p53
      %p55 = scmp.ne.s32.totalorder %s44, %s47
      %p56 = scmp.eq.s32.totalorder %s13, 1
      %p57 = por %p55, %p56
      %p58 = scmp.ne.s32.totalorder %s47, %s48
      %p59 = scmp.eq.s32.totalorder %s13, 0
      %p60 = por %p58, %p59
      %p61 = scmp.ne.s32.totalorder %s47, %s48
      %p62 = scmp.eq.s32.totalorder %s14, 1
      %p63 = por %p61, %p62
      %p65 = scmp.ne.s32.totalorder %s48, %s64
      %p66 = scmp.eq.s32.totalorder %s14, 0
      %p67 = por %p65, %p66
      %s68 = ssub.s32 %s8, %s15
      %p69 = scmp.eq.s32.totalorder %s68, 0
      %s71 = sadd.s32 %s70, 1
      %s72 = scalar_select %p69, %s70, %s71
      %p75 = pneg %p69
      %p76 = scmp.eq.s32.totalorder %s8, 1
      %p77 = por %p75, %p76
      %p78 = scmp.ne.s32.totalorder %s70, %s73
      %p79 = scmp.eq.s32.totalorder %s8, 0
      %p80 = por %p78, %p79
      %p81 = scmp.ne.s32.totalorder %s70, %s73
      %p82 = scmp.eq.s32.totalorder %s13, 1
      %p83 = por %p81, %p82
      %p84 = scmp.ne.s32.totalorder %s73, %s74
      %p85 = scmp.eq.s32.totalorder %s13, 0
      %p86 = por %p84, %p85
      %p87 = scmp.ne.s32.totalorder %s73, %s74
      %p88 = scmp.eq.s32.totalorder %s14, 1
      %p89 = por %p87, %p88
      %p91 = scmp.ne.s32.totalorder %s74, %s90
      %p92 = scmp.eq.s32.totalorder %s14, 0
      %p93 = por %p91, %p92
      %p94 = scmp.le.s32.totalorder 1, %s8
      %p95 = scmp.lt.s32.totalorder %s8, 3
      %p96 = pnand %p94, %p95
      %p97 = pneg %p96
      // Predicated region
      $region9: #{tpu_custom_call.1} parent=5 // pred_check
        _
      $region10: #{tpu_custom_call.1} parent=5 // pred_check_branch
        %99 = sbr.rel (%p96) target = $region12
      $region11: #{tpu_custom_call.1} parent=5 // pred_region
        %s100 = ssub.s32 %s8, 1
      $region12: #{tpu_custom_call.1} parent=5 // pred_fallthru
        _
      %p101 = scmp.lt.s32.totalorder %s8, 2
      // Predicated region
      $region13: #{tpu_custom_call.1} parent=5 // pred_check
        %p102 = pneg %p101
      $region14: #{tpu_custom_call.1} parent=5 // pred_check_branch
        %104 = sbr.rel (%p102) target = $region16
      $region15: #{tpu_custom_call.1} parent=5 // pred_region
        // Predicated region
        $region17: #{tpu_custom_call.1} parent=15 // pred_check
          %p105 = pneg %p28
        $region18: #{tpu_custom_call.1} parent=15 // pred_check_branch
          %107 = sbr.rel (%p105) target = $region20
        $region19: #{tpu_custom_call.1} parent=15 // pred_region
          %s108 = smul.u32 16, %s8
          %s109 = ssub.s32 25, %s108
          %p110 = scmp.lt.s32.totalorder %s109, 16
          %s111 = scalar_select %p110, %s109, 16
          %s112 = smul.u32 128, %s111
          %p113 = scmp.lt.s32.totalorder %s108, 24
          %s114 = scalar_select %p113, %s108, 24
          %s115 = smul.addr %s114, 8
          %s116 = scalar_lea.vmem %s0, %s115
          %s117 = smul.u32 16, %s8
          %s118 = ssub.s32 25, %s117
          %p119 = scmp.lt.s32.totalorder %s118, 16
          %s120 = scalar_select %p119, %s118, 16
          %s121 = smul.u32 128, %s120
        $region20: #{tpu_custom_call.1} parent=15 // pred_fallthru
          _
        // Predicated region
        $region21: #{tpu_custom_call.1} parent=15 // pred_check
          %p122 = pneg %p54
        $region22: #{tpu_custom_call.1} parent=15 // pred_check_branch
          %124 = sbr.rel (%p122) target = $region24
        $region23: #{tpu_custom_call.1} parent=15 // pred_region
          %s125 = smul.u32 16, %s8
          %s126 = ssub.s32 25, %s125
          %p127 = scmp.lt.s32.totalorder %s126, 16
          %s128 = scalar_select %p127, %s126, 16
          %s129 = smul.u32 128, %s128
          %p130 = scmp.lt.s32.totalorder %s125, 24
          %s131 = scalar_select %p130, %s125, 24
          %s132 = smul.addr %s131, 8
          %s133 = scalar_lea.vmem %s1, %s132
          %s134 = smul.u32 16, %s8
          %s135 = ssub.s32 25, %s134
          %p136 = scmp.lt.s32.totalorder %s135, 16
          %s137 = scalar_select %p136, %s135, 16
          %s138 = smul.u32 128, %s137
        $region24: #{tpu_custom_call.1} parent=15 // pred_fallthru
          _
      $region16: #{tpu_custom_call.1} parent=5 // pred_fallthru
        _
      %p139 = scmp.le.s32.totalorder 1, %s8
      %p140 = scmp.lt.s32.totalorder %s8, 3
      %p141 = pnand %p139, %p140
      %p142 = pneg %p141
      // Predicated region
      $region25: #{tpu_custom_call.1} parent=5 // pred_check
        _
      $region26: #{tpu_custom_call.1} parent=5 // pred_check_branch
        %144 = sbr.rel (%p141) target = $region28
      $region27: #{tpu_custom_call.1} parent=5 // pred_region
        %s145 = ssub.s32 %s8, 1
        %s146 = smul.u32 16, %s13
        %s147 = ssub.s32 25, %s146
        %p148 = scmp.lt.s32.totalorder %s147, 16
        %s149 = scalar_select %p148, %s147, 16
        %s150 = smul.u32 128, %s149
        %p151 = scmp.lt.s32.totalorder %s146, 24
        %s152 = scalar_select %p151, %s146, 24
        %s153 = smul.addr %s152, 8
        %s154 = scalar_lea.vmem %s0, %s153
        %p155 = pneg %p34
        %p156 = pneg %p31
        %s157 = smul.u32 16, %s13
        %s158 = ssub.s32 25, %s157
        %p159 = scmp.lt.s32.totalorder %s158, 16
        %s160 = scalar_select %p159, %s158, 16
        %s161 = smul.u32 128, %s160
        %p162 = scmp.lt.s32.totalorder %s157, 24
        %s163 = scalar_select %p162, %s157, 24
        %s164 = smul.addr %s163, 8
        %s165 = scalar_lea.vmem %s1, %s164
        %p166 = pneg %p60
        %p167 = pneg %p57
        %p168 = pneg %p86
        %p169 = pneg %p83
        %s170 = sand.u32 %s73, 1
        %s171 = sand.u32 %s73, 1
        %s172 = smul.addr %s171, 128
        %s173 = scalar_lea.vmem [#allocation2], %s172
        %s174 = smul.u32 16, %s13
        %s175 = ssub.s32 25, %s174
        %p176 = scmp.lt.s32.totalorder %s175, 16
        %s177 = scalar_select %p176, %s175, 16
        %s178 = smul.u32 128, %s177
        %p179 = scmp.lt.s32.totalorder %s174, 24
        %s180 = scalar_select %p179, %s174, 24
        %s181 = smul.addr %s180, 8
        %s182 = scalar_lea.vmem %s0, %s181
        %s183 = smul.u32 16, %s13
        %s184 = ssub.s32 25, %s183
        %p185 = scmp.lt.s32.totalorder %s184, 16
        %s186 = scalar_select %p185, %s184, 16
        %s187 = smul.u32 128, %s186
        %s188 = smul.u32 16, %s13
        %s189 = ssub.s32 25, %s188
        %p190 = scmp.lt.s32.totalorder %s189, 16
        %s191 = scalar_select %p190, %s189, 16
        %s192 = smul.u32 128, %s191
        %p193 = scmp.lt.s32.totalorder %s188, 24
        %s194 = scalar_select %p193, %s188, 24
        %s195 = smul.addr %s194, 8
        %s196 = scalar_lea.vmem %s1, %s195
        %s197 = smul.u32 16, %s13
        %s198 = ssub.s32 25, %s197
        %p199 = scmp.lt.s32.totalorder %s198, 16
        %s200 = scalar_select %p199, %s198, 16
        %s201 = smul.u32 128, %s200
        %s202 = smul.u32 16, %s13
        %s203 = ssub.s32 25, %s202
        %p204 = scmp.lt.s32.totalorder %s203, 16
        %s205 = scalar_select %p204, %s203, 16
        %s206 = smul.u32 128, %s205
        %v207 = vld [vmem:[%s182] sm:$0xff]
        %v208 = vld [vmem:[%s182 + $0x8] sm:$0xff]
        %v209 = vld [vmem:[%s182 + $0x10] sm:$0xff]
        %v210 = vld [vmem:[%s182 + $0x18] sm:$0xff]
        %v211 = vld [vmem:[%s182 + $0x20] sm:$0xff]
        %v212 = vld [vmem:[%s182 + $0x28] sm:$0xff]
        %v213 = vld [vmem:[%s182 + $0x30] sm:$0xff]
        %v214 = vld [vmem:[%s182 + $0x38] sm:$0xff]
        %v215 = vld [vmem:[%s182 + $0x40] sm:$0xff]
        %v216 = vld [vmem:[%s182 + $0x48] sm:$0xff]
        %v217 = vld [vmem:[%s182 + $0x50] sm:$0xff]
        %v218 = vld [vmem:[%s182 + $0x58] sm:$0xff]
        %v219 = vld [vmem:[%s182 + $0x60] sm:$0xff]
        %v220 = vld [vmem:[%s182 + $0x68] sm:$0xff]
        %v221 = vld [vmem:[%s182 + $0x70] sm:$0xff]
        %v222 = vld [vmem:[%s182 + $0x78] sm:$0xff]
        %v223 = vmul.f32 %v207, 0.1
        %v224 = vmul.f32 %v208, 0.1
        %v225 = vmul.f32 %v209, 0.1
        %v226 = vmul.f32 %v210, 0.1
        %v227 = vmul.f32 %v211, 0.1
        %v228 = vmul.f32 %v212, 0.1
        %v229 = vmul.f32 %v213, 0.1
        %v230 = vmul.f32 %v214, 0.1
        %v231 = vmul.f32 %v215, 0.1
        %v232 = vmul.f32 %v216, 0.1
        %v233 = vmul.f32 %v217, 0.1
        %v234 = vmul.f32 %v218, 0.1
        %v235 = vmul.f32 %v219, 0.1
        %v236 = vmul.f32 %v220, 0.1
        %v237 = vmul.f32 %v221, 0.1
        %v238 = vmul.f32 %v222, 0.1
        %v239 = vld [vmem:[%s196] sm:$0xff]
        %v240 = vld [vmem:[%s196 + $0x8] sm:$0xff]
        %v241 = vld [vmem:[%s196 + $0x10] sm:$0xff]
        %v242 = vld [vmem:[%s196 + $0x18] sm:$0xff]
        %v243 = vld [vmem:[%s196 + $0x20] sm:$0xff]
        %v244 = vld [vmem:[%s196 + $0x28] sm:$0xff]
        %v245 = vld [vmem:[%s196 + $0x30] sm:$0xff]
        %v246 = vld [vmem:[%s196 + $0x38] sm:$0xff]
        %v247 = vld [vmem:[%s196 + $0x40] sm:$0xff]
        %v248 = vld [vmem:[%s196 + $0x48] sm:$0xff]
        %v249 = vld [vmem:[%s196 + $0x50] sm:$0xff]
        %v250 = vld [vmem:[%s196 + $0x58] sm:$0xff]
        %v251 = vld [vmem:[%s196 + $0x60] sm:$0xff]
        %v252 = vld [vmem:[%s196 + $0x68] sm:$0xff]
        %v253 = vld [vmem:[%s196 + $0x70] sm:$0xff]
        %v254 = vld [vmem:[%s196 + $0x78] sm:$0xff]
        %v255 = vmul.f32 %v239, 0.1
        %v256 = vmul.f32 %v240, 0.1
        %v257 = vmul.f32 %v241, 0.1
        %v258 = vmul.f32 %v242, 0.1
        %v259 = vmul.f32 %v243, 0.1
        %v260 = vmul.f32 %v244, 0.1
        %v261 = vmul.f32 %v245, 0.1
        %v262 = vmul.f32 %v246, 0.1
        %v263 = vmul.f32 %v247, 0.1
        %v264 = vmul.f32 %v248, 0.1
        %v265 = vmul.f32 %v249, 0.1
        %v266 = vmul.f32 %v250, 0.1
        %v267 = vmul.f32 %v251, 0.1
        %v268 = vmul.f32 %v252, 0.1
        %v269 = vmul.f32 %v253, 0.1
        %v270 = vmul.f32 %v254, 0.1
        %vm271 = vcmask 662528
        %v272 = vsel %vm271, %v255, -inf
        %273 = vmax.xlane.f32.xlu0 %v272
        %v274 = vpop.xlane.xlu0 %273
        %v275 = vsel %vm271, %v256, -inf
        %276 = vmax.xlane.f32.xlu0 %v275
        %v277 = vpop.xlane.xlu0 %276
        %v278 = vsel %vm271, %v257, -inf
        %279 = vmax.xlane.f32.xlu0 %v278
        %v280 = vpop.xlane.xlu0 %279
        %v281 = vsel %vm271, %v258, -inf
        %282 = vmax.xlane.f32.xlu0 %v281
        %v283 = vpop.xlane.xlu0 %282
        %v284 = vsel %vm271, %v259, -inf
        %285 = vmax.xlane.f32.xlu0 %v284
        %v286 = vpop.xlane.xlu0 %285
        %v287 = vsel %vm271, %v260, -inf
        %288 = vmax.xlane.f32.xlu0 %v287
        %v289 = vpop.xlane.xlu0 %288
        %v290 = vsel %vm271, %v261, -inf
        %291 = vmax.xlane.f32.xlu0 %v290
        %v292 = vpop.xlane.xlu0 %291
        %v293 = vsel %vm271, %v262, -inf
        %294 = vmax.xlane.f32.xlu0 %v293
        %v295 = vpop.xlane.xlu0 %294
        %v296 = vsel %vm271, %v263, -inf
        %297 = vmax.xlane.f32.xlu0 %v296
        %v298 = vpop.xlane.xlu0 %297
        %v299 = vsel %vm271, %v264, -inf
        %300 = vmax.xlane.f32.xlu0 %v299
        %v301 = vpop.xlane.xlu0 %300
        %v302 = vsel %vm271, %v265, -inf
        %303 = vmax.xlane.f32.xlu0 %v302
        %v304 = vpop.xlane.xlu0 %303
        %v305 = vsel %vm271, %v266, -inf
        %306 = vmax.xlane.f32.xlu0 %v305
        %v307 = vpop.xlane.xlu0 %306
        %v308 = vsel %vm271, %v267, -inf
        %309 = vmax.xlane.f32.xlu0 %v308
        %v310 = vpop.xlane.xlu0 %309
        %v311 = vsel %vm271, %v268, -inf
        %312 = vmax.xlane.f32.xlu0 %v311
        %v313 = vpop.xlane.xlu0 %312
        %v314 = vsel %vm271, %v269, -inf
        %315 = vmax.xlane.f32.xlu0 %v314
        %v316 = vpop.xlane.xlu0 %315
        %v317 = vsel %vm271, %v270, -inf
        %318 = vmax.xlane.f32.xlu0 %v317
        %v319 = vpop.xlane.xlu0 %318
        %v320 = vsub.f32 %v255, %v274
        %v321 = vsub.f32 %v256, %v277
        %v322 = vsub.f32 %v257, %v280
        %v323 = vsub.f32 %v258, %v283
        %v324 = vsub.f32 %v259, %v286
        %v325 = vsub.f32 %v260, %v289
        %v326 = vsub.f32 %v261, %v292
        %v327 = vsub.f32 %v262, %v295
        %v328 = vsub.f32 %v263, %v298
        %v329 = vsub.f32 %v264, %v301
        %v330 = vsub.f32 %v265, %v304
        %v331 = vsub.f32 %v266, %v307
        %v332 = vsub.f32 %v267, %v310
        %v333 = vsub.f32 %v268, %v313
        %v334 = vsub.f32 %v269, %v316
        %v335 = vsub.f32 %v270, %v319
        %v336 = vsel %vm271, %v223, -inf
        %337 = vmax.xlane.f32.xlu0 %v336
        %v338 = vpop.xlane.xlu0 %337
        %v339 = vsel %vm271, %v224, -inf
        %340 = vmax.xlane.f32.xlu0 %v339
        %v341 = vpop.xlane.xlu0 %340
        %v342 = vsel %vm271, %v225, -inf
        %343 = vmax.xlane.f32.xlu0 %v342
        %v344 = vpop.xlane.xlu0 %343
        %v345 = vsel %vm271, %v226, -inf
        %346 = vmax.xlane.f32.xlu0 %v345
        %v347 = vpop.xlane.xlu0 %346
        %v348 = vsel %vm271, %v227, -inf
        %349 = vmax.xlane.f32.xlu0 %v348
        %v350 = vpop.xlane.xlu0 %349
        %v351 = vsel %vm271, %v228, -inf
        %352 = vmax.xlane.f32.xlu0 %v351
        %v353 = vpop.xlane.xlu0 %352
        %v354 = vsel %vm271, %v229, -inf
        %355 = vmax.xlane.f32.xlu0 %v354
        %v356 = vpop.xlane.xlu0 %355
        %v357 = vsel %vm271, %v230, -inf
        %358 = vmax.xlane.f32.xlu0 %v357
        %v359 = vpop.xlane.xlu0 %358
        %v360 = vsel %vm271, %v231, -inf
        %361 = vmax.xlane.f32.xlu0 %v360
        %v362 = vpop.xlane.xlu0 %361
        %v363 = vsel %vm271, %v232, -inf
        %364 = vmax.xlane.f32.xlu0 %v363
        %v365 = vpop.xlane.xlu0 %364
        %v366 = vsel %vm271, %v233, -inf
        %367 = vmax.xlane.f32.xlu0 %v366
        %v368 = vpop.xlane.xlu0 %367
        %v369 = vsel %vm271, %v234, -inf
        %370 = vmax.xlane.f32.xlu0 %v369
        %v371 = vpop.xlane.xlu0 %370
        %v372 = vsel %vm271, %v235, -inf
        %373 = vmax.xlane.f32.xlu0 %v372
        %v374 = vpop.xlane.xlu0 %373
        %v375 = vsel %vm271, %v236, -inf
        %376 = vmax.xlane.f32.xlu0 %v375
        %v377 = vpop.xlane.xlu0 %376
        %v378 = vsel %vm271, %v237, -inf
        %379 = vmax.xlane.f32.xlu0 %v378
        %v380 = vpop.xlane.xlu0 %379
        %v381 = vsel %vm271, %v238, -inf
        %382 = vmax.xlane.f32.xlu0 %v381
        %v383 = vpop.xlane.xlu0 %382
        %v384 = vsub.f32 %v223, %v338
        %v385 = vsub.f32 %v224, %v341
        %v386 = vsub.f32 %v225, %v344
        %v387 = vsub.f32 %v226, %v347
        %v388 = vsub.f32 %v227, %v350
        %v389 = vsub.f32 %v228, %v353
        %v390 = vsub.f32 %v229, %v356
        %v391 = vsub.f32 %v230, %v359
        %v392 = vsub.f32 %v231, %v362
        %v393 = vsub.f32 %v232, %v365
        %v394 = vsub.f32 %v233, %v368
        %v395 = vsub.f32 %v234, %v371
        %v396 = vsub.f32 %v235, %v374
        %v397 = vsub.f32 %v236, %v377
        %v398 = vsub.f32 %v237, %v380
        %v399 = vsub.f32 %v238, %v383
        %v400 = vmul.f32 %v320, 1.442695
        %v401 = vpow.pop %v400
        %v402 = vmul.f32 %v321, 1.442695
        %v403 = vpow.pop %v402
        %v404 = vmul.f32 %v322, 1.442695
        %v405 = vpow.pop %v404
        %v406 = vmul.f32 %v323, 1.442695
        %v407 = vpow.pop %v406
        %v408 = vmul.f32 %v324, 1.442695
        %v409 = vpow.pop %v408
        %v410 = vmul.f32 %v325, 1.442695
        %v411 = vpow.pop %v410
        %v412 = vmul.f32 %v326, 1.442695
        %v413 = vpow.pop %v412
        %v414 = vmul.f32 %v327, 1.442695
        %v415 = vpow.pop %v414
        %v416 = vmul.f32 %v328, 1.442695
        %v417 = vpow.pop %v416
        %v418 = vmul.f32 %v329, 1.442695
        %v419 = vpow.pop %v418
        %v420 = vmul.f32 %v330, 1.442695
        %v421 = vpow.pop %v420
        %v422 = vmul.f32 %v331, 1.442695
        %v423 = vpow.pop %v422
        %v424 = vmul.f32 %v332, 1.442695
        %v425 = vpow.pop %v424
        %v426 = vmul.f32 %v333, 1.442695
        %v427 = vpow.pop %v426
        %v428 = vmul.f32 %v334, 1.442695
        %v429 = vpow.pop %v428
        %v430 = vmul.f32 %v335, 1.442695
        %v431 = vpow.pop %v430
        %v432 = vmul.f32 %v384, 1.442695
        %v433 = vpow.pop %v432
        %v434 = vmul.f32 %v385, 1.442695
        %v435 = vpow.pop %v434
        %v436 = vmul.f32 %v386, 1.442695
        %v437 = vpow.pop %v436
        %v438 = vmul.f32 %v387, 1.442695
        %v439 = vpow.pop %v438
        %v440 = vmul.f32 %v388, 1.442695
        %v441 = vpow.pop %v440
        %v442 = vmul.f32 %v389, 1.442695
        %v443 = vpow.pop %v442
        %v444 = vmul.f32 %v390, 1.442695
        %v445 = vpow.pop %v444
        %v446 = vmul.f32 %v391, 1.442695
        %v447 = vpow.pop %v446
        %v448 = vmul.f32 %v392, 1.442695
        %v449 = vpow.pop %v448
        %v450 = vmul.f32 %v393, 1.442695
        %v451 = vpow.pop %v450
        %v452 = vmul.f32 %v394, 1.442695
        %v453 = vpow.pop %v452
        %v454 = vmul.f32 %v395, 1.442695
        %v455 = vpow.pop %v454
        %v456 = vmul.f32 %v396, 1.442695
        %v457 = vpow.pop %v456
        %v458 = vmul.f32 %v397, 1.442695
        %v459 = vpow.pop %v458
        %v460 = vmul.f32 %v398, 1.442695
        %v461 = vpow.pop %v460
        %v462 = vmul.f32 %v399, 1.442695
        %v463 = vpow.pop %v462
        %v464 = vsel %vm271, %v401, 0.0
        %465 = vadd.xlane.f32.xlu0 %v464
        %v466 = vpop.xlane.xlu0 %465
        %v467 = vsel %vm271, %v403, 0.0
        %468 = vadd.xlane.f32.xlu0 %v467
        %v469 = vpop.xlane.xlu0 %468
        %v470 = vsel %vm271, %v405, 0.0
        %471 = vadd.xlane.f32.xlu0 %v470
        %v472 = vpop.xlane.xlu0 %471
        %v473 = vsel %vm271, %v407, 0.0
        %474 = vadd.xlane.f32.xlu0 %v473
        %v475 = vpop.xlane.xlu0 %474
        %v476 = vsel %vm271, %v409, 0.0
        %477 = vadd.xlane.f32.xlu0 %v476
        %v478 = vpop.xlane.xlu0 %477
        %v479 = vsel %vm271, %v411, 0.0
        %480 = vadd.xlane.f32.xlu0 %v479
        %v481 = vpop.xlane.xlu0 %480
        %v482 = vsel %vm271, %v413, 0.0
        %483 = vadd.xlane.f32.xlu0 %v482
        %v484 = vpop.xlane.xlu0 %483
        %v485 = vsel %vm271, %v415, 0.0
        %486 = vadd.xlane.f32.xlu0 %v485
        %v487 = vpop.xlane.xlu0 %486
        %v488 = vsel %vm271, %v417, 0.0
        %489 = vadd.xlane.f32.xlu0 %v488
        %v490 = vpop.xlane.xlu0 %489
        %v491 = vsel %vm271, %v419, 0.0
        %492 = vadd.xlane.f32.xlu0 %v491
        %v493 = vpop.xlane.xlu0 %492
        %v494 = vsel %vm271, %v421, 0.0
        %495 = vadd.xlane.f32.xlu0 %v494
        %v496 = vpop.xlane.xlu0 %495
        %v497 = vsel %vm271, %v423, 0.0
        %498 = vadd.xlane.f32.xlu0 %v497
        %v499 = vpop.xlane.xlu0 %498
        %v500 = vsel %vm271, %v425, 0.0
        %501 = vadd.xlane.f32.xlu0 %v500
        %v502 = vpop.xlane.xlu0 %501
        %v503 = vsel %vm271, %v427, 0.0
        %504 = vadd.xlane.f32.xlu0 %v503
        %v505 = vpop.xlane.xlu0 %504
        %v506 = vsel %vm271, %v429, 0.0
        %507 = vadd.xlane.f32.xlu0 %v506
        %v508 = vpop.xlane.xlu0 %507
        %v509 = vsel %vm271, %v431, 0.0
        %510 = vadd.xlane.f32.xlu0 %v509
        %v511 = vpop.xlane.xlu0 %510
        %v512 = vsel %vm271, %v433, 0.0
        %513 = vadd.xlane.f32.xlu0 %v512
        %v514 = vpop.xlane.xlu0 %513
        %v515 = vsel %vm271, %v435, 0.0
        %516 = vadd.xlane.f32.xlu0 %v515
        %v517 = vpop.xlane.xlu0 %516
        %v518 = vsel %vm271, %v437, 0.0
        %519 = vadd.xlane.f32.xlu0 %v518
        %v520 = vpop.xlane.xlu0 %519
        %v521 = vsel %vm271, %v439, 0.0
        %522 = vadd.xlane.f32.xlu0 %v521
        %v523 = vpop.xlane.xlu0 %522
        %v524 = vsel %vm271, %v441, 0.0
        %525 = vadd.xlane.f32.xlu0 %v524
        %v526 = vpop.xlane.xlu0 %525
        %v527 = vsel %vm271, %v443, 0.0
        %528 = vadd.xlane.f32.xlu0 %v527
        %v529 = vpop.xlane.xlu0 %528
        %v530 = vsel %vm271, %v445, 0.0
        %531 = vadd.xlane.f32.xlu0 %v530
        %v532 = vpop.xlane.xlu0 %531
        %v533 = vsel %vm271, %v447, 0.0
        %534 = vadd.xlane.f32.xlu0 %v533
        %v535 = vpop.xlane.xlu0 %534
        %v536 = vsel %vm271, %v449, 0.0
        %537 = vadd.xlane.f32.xlu0 %v536
        %v538 = vpop.xlane.xlu0 %537
        %v539 = vsel %vm271, %v451, 0.0
        %540 = vadd.xlane.f32.xlu0 %v539
        %v541 = vpop.xlane.xlu0 %540
        %v542 = vsel %vm271, %v453, 0.0
        %543 = vadd.xlane.f32.xlu0 %v542
        %v544 = vpop.xlane.xlu0 %543
        %v545 = vsel %vm271, %v455, 0.0
        %546 = vadd.xlane.f32.xlu0 %v545
        %v547 = vpop.xlane.xlu0 %546
        %v548 = vsel %vm271, %v457, 0.0
        %549 = vadd.xlane.f32.xlu0 %v548
        %v550 = vpop.xlane.xlu0 %549
        %v551 = vsel %vm271, %v459, 0.0
        %552 = vadd.xlane.f32.xlu0 %v551
        %v553 = vpop.xlane.xlu0 %552
        %v554 = vsel %vm271, %v461, 0.0
        %555 = vadd.xlane.f32.xlu0 %v554
        %v556 = vpop.xlane.xlu0 %555
        %v557 = vsel %vm271, %v463, 0.0
        %558 = vadd.xlane.f32.xlu0 %v557
        %v559 = vpop.xlane.xlu0 %558
        %v560 = vsub.f32 %v320, %v384
        %v561 = vsub.f32 %v321, %v385
        %v562 = vsub.f32 %v322, %v386
        %v563 = vsub.f32 %v323, %v387
        %v564 = vsub.f32 %v324, %v388
        %v565 = vsub.f32 %v325, %v389
        %v566 = vsub.f32 %v326, %v390
        %v567 = vsub.f32 %v327, %v391
        %v568 = vsub.f32 %v328, %v392
        %v569 = vsub.f32 %v329, %v393
        %v570 = vsub.f32 %v330, %v394
        %v571 = vsub.f32 %v331, %v395
        %v572 = vsub.f32 %v332, %v396
        %v573 = vsub.f32 %v333, %v397
        %v574 = vsub.f32 %v334, %v398
        %v575 = vsub.f32 %v335, %v399
        %v576 = vmul.f32 %v401, %v560
        %v577 = vmul.f32 %v403, %v561
        %v578 = vmul.f32 %v405, %v562
        %v579 = vmul.f32 %v407, %v563
        %v580 = vmul.f32 %v409, %v564
        %v581 = vmul.f32 %v411, %v565
        %v582 = vmul.f32 %v413, %v566
        %v583 = vmul.f32 %v415, %v567
        %v584 = vmul.f32 %v417, %v568
        %v585 = vmul.f32 %v419, %v569
        %v586 = vmul.f32 %v421, %v570
        %v587 = vmul.f32 %v423, %v571
        %v588 = vmul.f32 %v425, %v572
        %v589 = vmul.f32 %v427, %v573
        %v590 = vmul.f32 %v429, %v574
        %v591 = vmul.f32 %v431, %v575
        %v592 = vsel %vm271, %v576, 0.0
        %593 = vadd.xlane.f32.xlu0 %v592
        %v594 = vpop.xlane.xlu0 %593
        %v595 = vsel %vm271, %v577, 0.0
        %596 = vadd.xlane.f32.xlu0 %v595
        %v597 = vpop.xlane.xlu0 %596
        %v598 = vsel %vm271, %v578, 0.0
        %599 = vadd.xlane.f32.xlu0 %v598
        %v600 = vpop.xlane.xlu0 %599
        %v601 = vsel %vm271, %v579, 0.0
        %602 = vadd.xlane.f32.xlu0 %v601
        %v603 = vpop.xlane.xlu0 %602
        %v604 = vsel %vm271, %v580, 0.0
        %605 = vadd.xlane.f32.xlu0 %v604
        %v606 = vpop.xlane.xlu0 %605
        %v607 = vsel %vm271, %v581, 0.0
        %608 = vadd.xlane.f32.xlu0 %v607
        %v609 = vpop.xlane.xlu0 %608
        %v610 = vsel %vm271, %v582, 0.0
        %611 = vadd.xlane.f32.xlu0 %v610
        %v612 = vpop.xlane.xlu0 %611
        %v613 = vsel %vm271, %v583, 0.0
        %614 = vadd.xlane.f32.xlu0 %v613
        %v615 = vpop.xlane.xlu0 %614
        %v616 = vsel %vm271, %v584, 0.0
        %617 = vadd.xlane.f32.xlu0 %v616
        %v618 = vpop.xlane.xlu0 %617
        %v619 = vsel %vm271, %v585, 0.0
        %620 = vadd.xlane.f32.xlu0 %v619
        %v621 = vpop.xlane.xlu0 %620
        %v622 = vsel %vm271, %v586, 0.0
        %623 = vadd.xlane.f32.xlu0 %v622
        %v624 = vpop.xlane.xlu0 %623
        %v625 = vsel %vm271, %v587, 0.0
        %626 = vadd.xlane.f32.xlu0 %v625
        %v627 = vpop.xlane.xlu0 %626
        %v628 = vsel %vm271, %v588, 0.0
        %629 = vadd.xlane.f32.xlu0 %v628
        %v630 = vpop.xlane.xlu0 %629
        %v631 = vsel %vm271, %v589, 0.0
        %632 = vadd.xlane.f32.xlu0 %v631
        %v633 = vpop.xlane.xlu0 %632
        %v634 = vsel %vm271, %v590, 0.0
        %635 = vadd.xlane.f32.xlu0 %v634
        %v636 = vpop.xlane.xlu0 %635
        %v637 = vsel %vm271, %v591, 0.0
        %638 = vadd.xlane.f32.xlu0 %v637
        %v639 = vpop.xlane.xlu0 %638
        %v640 = vrcp.pop %v466
        %v641 = vmul.f32 %v594, %v640
        %v642 = vrcp.pop %v469
        %v643 = vmul.f32 %v597, %v642
        %v644 = vrcp.pop %v472
        %v645 = vmul.f32 %v600, %v644
        %v646 = vrcp.pop %v475
        %v647 = vmul.f32 %v603, %v646
        %v648 = vrcp.pop %v478
        %v649 = vmul.f32 %v606, %v648
        %v650 = vrcp.pop %v481
        %v651 = vmul.f32 %v609, %v650
        %v652 = vrcp.pop %v484
        %v653 = vmul.f32 %v612, %v652
        %v654 = vrcp.pop %v487
        %v655 = vmul.f32 %v615, %v654
        %v656 = vrcp.pop %v490
        %v657 = vmul.f32 %v618, %v656
        %v658 = vrcp.pop %v493
        %v659 = vmul.f32 %v621, %v658
        %v660 = vrcp.pop %v496
        %v661 = vmul.f32 %v624, %v660
        %v662 = vrcp.pop %v499
        %v663 = vmul.f32 %v627, %v662
        %v664 = vrcp.pop %v502
        %v665 = vmul.f32 %v630, %v664
        %v666 = vrcp.pop %v505
        %v667 = vmul.f32 %v633, %v666
        %v668 = vrcp.pop %v508
        %v669 = vmul.f32 %v636, %v668
        %v670 = vrcp.pop %v511
        %v671 = vmul.f32 %v639, %v670
        %v672 = vlog2.pop %v466
        %v673 = vmul.f32 %v672, 0.6931472
        %v674 = vlog2.pop %v469
        %v675 = vmul.f32 %v674, 0.6931472
        %v676 = vlog2.pop %v472
        %v677 = vmul.f32 %v676, 0.6931472
        %v678 = vlog2.pop %v475
        %v679 = vmul.f32 %v678, 0.6931472
        %v680 = vlog2.pop %v478
        %v681 = vmul.f32 %v680, 0.6931472
        %v682 = vlog2.pop %v481
        %v683 = vmul.f32 %v682, 0.6931472
        %v684 = vlog2.pop %v484
        %v685 = vmul.f32 %v684, 0.6931472
        %v686 = vlog2.pop %v487
        %v687 = vmul.f32 %v686, 0.6931472
        %v688 = vlog2.pop %v490
        %v689 = vmul.f32 %v688, 0.6931472
        %v690 = vlog2.pop %v493
        %v691 = vmul.f32 %v690, 0.6931472
        %v692 = vlog2.pop %v496
        %v693 = vmul.f32 %v692, 0.6931472
        %v694 = vlog2.pop %v499
        %v695 = vmul.f32 %v694, 0.6931472
        %v696 = vlog2.pop %v502
        %v697 = vmul.f32 %v696, 0.6931472
        %v698 = vlog2.pop %v505
        %v699 = vmul.f32 %v698, 0.6931472
        %v700 = vlog2.pop %v508
        %v701 = vmul.f32 %v700, 0.6931472
        %v702 = vlog2.pop %v511
        %v703 = vmul.f32 %v702, 0.6931472
        %v704 = vsub.f32 %v641, %v673
        %v705 = vsub.f32 %v643, %v675
        %v706 = vsub.f32 %v645, %v677
        %v707 = vsub.f32 %v647, %v679
        %v708 = vsub.f32 %v649, %v681
        %v709 = vsub.f32 %v651, %v683
        %v710 = vsub.f32 %v653, %v685
        %v711 = vsub.f32 %v655, %v687
        %v712 = vsub.f32 %v657, %v689
        %v713 = vsub.f32 %v659, %v691
        %v714 = vsub.f32 %v661, %v693
        %v715 = vsub.f32 %v663, %v695
        %v716 = vsub.f32 %v665, %v697
        %v717 = vsub.f32 %v667, %v699
        %v718 = vsub.f32 %v669, %v701
        %v719 = vsub.f32 %v671, %v703
        %v720 = vlog2.pop %v514
        %v721 = vmul.f32 %v720, 0.6931472
        %v722 = vlog2.pop %v517
        %v723 = vmul.f32 %v722, 0.6931472
        %v724 = vlog2.pop %v520
        %v725 = vmul.f32 %v724, 0.6931472
        %v726 = vlog2.pop %v523
        %v727 = vmul.f32 %v726, 0.6931472
        %v728 = vlog2.pop %v526
        %v729 = vmul.f32 %v728, 0.6931472
        %v730 = vlog2.pop %v529
        %v731 = vmul.f32 %v730, 0.6931472
        %v732 = vlog2.pop %v532
        %v733 = vmul.f32 %v732, 0.6931472
        %v734 = vlog2.pop %v535
        %v735 = vmul.f32 %v734, 0.6931472
        %v736 = vlog2.pop %v538
        %v737 = vmul.f32 %v736, 0.6931472
        %v738 = vlog2.pop %v541
        %v739 = vmul.f32 %v738, 0.6931472
        %v740 = vlog2.pop %v544
        %v741 = vmul.f32 %v740, 0.6931472
        %v742 = vlog2.pop %v547
        %v743 = vmul.f32 %v742, 0.6931472
        %v744 = vlog2.pop %v550
        %v745 = vmul.f32 %v744, 0.6931472
        %v746 = vlog2.pop %v553
        %v747 = vmul.f32 %v746, 0.6931472
        %v748 = vlog2.pop %v556
        %v749 = vmul.f32 %v748, 0.6931472
        %v750 = vlog2.pop %v559
        %v751 = vmul.f32 %v750, 0.6931472
        %v752 = vadd.f32 %v704, %v721
        %v753 = vadd.f32 %v705, %v723
        %v754 = vadd.f32 %v706, %v725
        %v755 = vadd.f32 %v707, %v727
        %v756 = vadd.f32 %v708, %v729
        %v757 = vadd.f32 %v709, %v731
        %v758 = vadd.f32 %v710, %v733
        %v759 = vadd.f32 %v711, %v735
        %v760 = vadd.f32 %v712, %v737
        %v761 = vadd.f32 %v713, %v739
        %v762 = vadd.f32 %v714, %v741
        %v763 = vadd.f32 %v715, %v743
        %v764 = vadd.f32 %v716, %v745
        %v765 = vadd.f32 %v717, %v747
        %v766 = vadd.f32 %v718, %v749
        %v767 = vadd.f32 %v719, %v751
        %v768 = vmul.f32 %v752, 1.2345679
        %v769 = vmul.f32 %v753, 1.2345679
        %v770 = vmul.f32 %v754, 1.2345679
        %v771 = vmul.f32 %v755, 1.2345679
        %v772 = vmul.f32 %v756, 1.2345679
        %v773 = vmul.f32 %v757, 1.2345679
        %v774 = vmul.f32 %v758, 1.2345679
        %v775 = vmul.f32 %v759, 1.2345679
        %v776 = vmul.f32 %v760, 1.2345679
        %v777 = vmul.f32 %v761, 1.2345679
        %v778 = vmul.f32 %v762, 1.2345679
        %v779 = vmul.f32 %v763, 1.2345679
        %v780 = vmul.f32 %v764, 1.2345679
        %v781 = vmul.f32 %v765, 1.2345679
        %v782 = vmul.f32 %v766, 1.2345679
        %v783 = vmul.f32 %v767, 1.2345679
        %vm784 = vcmask 7168
        %785 = vst.msk [vmem:[%s173] sm:$0xff] %vm784, %v768
        %786 = vst.msk [vmem:[%s173 + $0x8] sm:$0xff] %vm784, %v769
        %787 = vst.msk [vmem:[%s173 + $0x10] sm:$0xff] %vm784, %v770
        %788 = vst.msk [vmem:[%s173 + $0x18] sm:$0xff] %vm784, %v771
        %789 = vst.msk [vmem:[%s173 + $0x20] sm:$0xff] %vm784, %v772
        %790 = vst.msk [vmem:[%s173 + $0x28] sm:$0xff] %vm784, %v773
        %791 = vst.msk [vmem:[%s173 + $0x30] sm:$0xff] %vm784, %v774
        %792 = vst.msk [vmem:[%s173 + $0x38] sm:$0xff] %vm784, %v775
        %793 = vst.msk [vmem:[%s173 + $0x40] sm:$0xff] %vm784, %v776
        %794 = vst.msk [vmem:[%s173 + $0x48] sm:$0xff] %vm784, %v777
        %795 = vst.msk [vmem:[%s173 + $0x50] sm:$0xff] %vm784, %v778
        %796 = vst.msk [vmem:[%s173 + $0x58] sm:$0xff] %vm784, %v779
        %797 = vst.msk [vmem:[%s173 + $0x60] sm:$0xff] %vm784, %v780
        %798 = vst.msk [vmem:[%s173 + $0x68] sm:$0xff] %vm784, %v781
        %799 = vst.msk [vmem:[%s173 + $0x70] sm:$0xff] %vm784, %v782
        %800 = vst.msk [vmem:[%s173 + $0x78] sm:$0xff] %vm784, %v783
        %s801 = sand.u32 %s73, 1
        %s802 = sand.u32 %s73, 1
        %s803 = smul.addr %s802, 128
        %s804 = scalar_lea.vmem [#allocation2], %s803
        // Predicated region
        $region29: #{tpu_custom_call.1} parent=27 // pred_check
          %p805 = pneg %p83
        $region30: #{tpu_custom_call.1} parent=27 // pred_check_branch
          %807 = sbr.rel (%p805) target = $region32
        $region31: #{tpu_custom_call.1} parent=27 // pred_region
          %s808 = smul.u32 16, %s13
          %s809 = ssub.s32 25, %s808
          %p810 = scmp.lt.s32.totalorder %s809, 16
          %s811 = scalar_select %p810, %s809, 16
          %s812 = smul.u32 128, %s811
          %p813 = scmp.ne.s32.totalorder 0, %s812
          %s814 = smul.addr %s808, 8
          %s815 = scalar_lea.vmem %s2, %s814
          // Predicated region
          $region33: #{tpu_custom_call.1} parent=31 // pred_check
            %p816 = pneg %p813
          $region34: #{tpu_custom_call.1} parent=31 // pred_check_branch
            %818 = sbr.rel (%p816) target = $region36
          $region35: #{tpu_custom_call.1} parent=31 // pred_region
            // Predicated region
            $region37: #{tpu_custom_call.1} parent=35 // pred_check
              _
            $region38: #{tpu_custom_call.1} parent=35 // pred_check_branch
              %820 = sbr.rel (0) target = $region40
            $region39: #{tpu_custom_call.1} parent=35 // pred_region
              // Predicated region
              $region59: #{tpu_custom_call.1} parent=39 // pred_check
                _
              $region60: #{tpu_custom_call.1} parent=39 // pred_check_branch
                %899 = sbr.rel (0) target = $region62
              $region61: #{tpu_custom_call.1} parent=39 // pred_region
                %s900 = sshrl.u32 %s811, 4
                // While loop
                $region63: #{tpu_custom_call.1} parent=61 // loop_pre_header
                  _
                $region64: #{tpu_custom_call.1} parent=61 // loop_header
                  %s902 = sphi 0, %s904
                  %p903 = scmp.ge.s32.totalorder %s902, %s900
                  %s907 = sphi 0, %s944
                  %s908 = sphi %s804, %s947
                  %s909 = sphi %s815, %s948
                $region65: #{tpu_custom_call.1} parent=61 // loop_header_branch
                  %906 = sbr.rel (%p903) target = $region69
                $region66: #{tpu_custom_call.1} parent=61 // loop_body
                  %v910 = vld [vmem:[%s908] sm:$0xff]
                  %911 = vst [vmem:[%s909] sm:$0xff] %v910
                  %v912 = vld [vmem:[%s908 + $0x8] sm:$0xff]
                  %913 = vst [vmem:[%s909 + $0x8] sm:$0xff] %v912
                  %v914 = vld [vmem:[%s908 + $0x10] sm:$0xff]
                  %915 = vst [vmem:[%s909 + $0x10] sm:$0xff] %v914
                  %v916 = vld [vmem:[%s908 + $0x18] sm:$0xff]
                  %917 = vst [vmem:[%s909 + $0x18] sm:$0xff] %v916
                  %v918 = vld [vmem:[%s908 + $0x20] sm:$0xff]
                  %919 = vst [vmem:[%s909 + $0x20] sm:$0xff] %v918
                  %v920 = vld [vmem:[%s908 + $0x28] sm:$0xff]
                  %921 = vst [vmem:[%s909 + $0x28] sm:$0xff] %v920
                  %v922 = vld [vmem:[%s908 + $0x30] sm:$0xff]
                  %923 = vst [vmem:[%s909 + $0x30] sm:$0xff] %v922
                  %v924 = vld [vmem:[%s908 + $0x38] sm:$0xff]
                  %925 = vst [vmem:[%s909 + $0x38] sm:$0xff] %v924
                  %v926 = vld [vmem:[%s908 + $0x40] sm:$0xff]
                  %927 = vst [vmem:[%s909 + $0x40] sm:$0xff] %v926
                  %v928 = vld [vmem:[%s908 + $0x48] sm:$0xff]
                  %929 = vst [vmem:[%s909 + $0x48] sm:$0xff] %v928
                  %v930 = vld [vmem:[%s908 + $0x50] sm:$0xff]
                  %931 = vst [vmem:[%s909 + $0x50] sm:$0xff] %v930
                  %v932 = vld [vmem:[%s908 + $0x58] sm:$0xff]
                  %933 = vst [vmem:[%s909 + $0x58] sm:$0xff] %v932
                  %v934 = vld [vmem:[%s908 + $0x60] sm:$0xff]
                  %935 = vst [vmem:[%s909 + $0x60] sm:$0xff] %v934
                  %v936 = vld [vmem:[%s908 + $0x68] sm:$0xff]
                  %937 = vst [vmem:[%s909 + $0x68] sm:$0xff] %v936
                  %v938 = vld [vmem:[%s908 + $0x70] sm:$0xff]
                  %939 = vst [vmem:[%s909 + $0x70] sm:$0xff] %v938
                  %v940 = vld [vmem:[%s908 + $0x78] sm:$0xff]
                  %941 = vst [vmem:[%s909 + $0x78] sm:$0xff] %v940
                  %s942 = sadd.s32 1, %s907
                  %p943 = scmp.ge.s32.totalorder %s942, %s900
                  %s944 = scalar_select %p943, 0, %s942
                  %s945 = smul.u32 %s944, 128
                  %s946 = smul.u32 %s944, 128
                  %s947 = scalar_lea.vmem %s804, %s945 [#allocation2]
                  %s948 = scalar_lea.vmem %s815, %s946
                $region67: #{tpu_custom_call.1} parent=61 // loop_footer
                  %s904 = sadd.s32 %s902, 1
                $region68: #{tpu_custom_call.1} parent=61 // loop_footer_branch
                  %901 = sbr.rel target = $region64
                $region69: #{tpu_custom_call.1} parent=61 // loop_exit
                  _
                %s949 = sshrl.u32 %s811, 4
                %s950 = sand.u32 %s811, 15
                %s951 = smul.u32 %s949, 16
                %s952 = smul.u32 8, %s951
                %s953 = scalar_lea.vmem %s804, %s952 [#allocation2]
                %s954 = smul.u32 8, %s951
                %s955 = scalar_lea.vmem %s815, %s954
                // While loop
                $region70: #{tpu_custom_call.1} parent=61 // loop_pre_header
                  _
                $region71: #{tpu_custom_call.1} parent=61 // loop_header
                  %s957 = sphi 0, %s959
                  %p958 = scmp.ge.s32.totalorder %s957, %s950
                  %s962 = sphi 0, %s969
                  %s963 = sphi %s953, %s972
                  %s964 = sphi %s955, %s973
                $region72: #{tpu_custom_call.1} parent=61 // loop_header_branch
                  %961 = sbr.rel (%p958) target = $region76
                $region73: #{tpu_custom_call.1} parent=61 // loop_body
                  %v965 = vld [vmem:[%s963] sm:$0xff]
                  %966 = vst [vmem:[%s964] sm:$0xff] %v965
                  %s967 = sadd.s32 1, %s962
                  %p968 = scmp.ge.s32.totalorder %s967, %s950
                  %s969 = scalar_select %p968, 0, %s967
                  %s970 = smul.u32 %s969, 8
                  %s971 = smul.u32 %s969, 8
                  %s972 = scalar_lea.vmem %s953, %s970 [#allocation2]
                  %s973 = scalar_lea.vmem %s955, %s971
                $region74: #{tpu_custom_call.1} parent=61 // loop_footer
                  %s959 = sadd.s32 %s957, 1
                $region75: #{tpu_custom_call.1} parent=61 // loop_footer_branch
                  %956 = sbr.rel target = $region71
                $region76: #{tpu_custom_call.1} parent=61 // loop_exit
                  _
              $region62: #{tpu_custom_call.1} parent=39 // pred_fallthru
                _
              // Predicated region
              $region77: #{tpu_custom_call.1} parent=39 // pred_check
                _
              $region78: #{tpu_custom_call.1} parent=39 // pred_check_branch
                %975 = sbr.rel target = $region80
              $region79: #{tpu_custom_call.1} parent=39 // pred_region
                _
              $region80: #{tpu_custom_call.1} parent=39 // pred_fallthru
                _
            $region40: #{tpu_custom_call.1} parent=35 // pred_fallthru
              _
            // Predicated region
            $region41: #{tpu_custom_call.1} parent=35 // pred_check
              _
            $region42: #{tpu_custom_call.1} parent=35 // pred_check_branch
              %822 = sbr.rel target = $region44
            $region43: #{tpu_custom_call.1} parent=35 // pred_region
              %s824 = sshrl.u32 %s811, 4
              // While loop
              $region45: #{tpu_custom_call.1} parent=43 // loop_pre_header
                _
              $region46: #{tpu_custom_call.1} parent=43 // loop_header
                %s826 = sphi 0, %s828
                %p827 = scmp.ge.s32.totalorder %s826, %s824
                %s831 = sphi 0, %s868
                %s832 = sphi %s804, %s871
                %s833 = sphi %s815, %s872
              $region47: #{tpu_custom_call.1} parent=43 // loop_header_branch
                %830 = sbr.rel (%p827) target = $region51
              $region48: #{tpu_custom_call.1} parent=43 // loop_body
                %v834 = vld [vmem:[%s832] sm:$0xff]
                %835 = vst [vmem:[%s833] sm:$0xff] %v834
                %v836 = vld [vmem:[%s832 + $0x8] sm:$0xff]
                %837 = vst [vmem:[%s833 + $0x8] sm:$0xff] %v836
                %v838 = vld [vmem:[%s832 + $0x10] sm:$0xff]
                %839 = vst [vmem:[%s833 + $0x10] sm:$0xff] %v838
                %v840 = vld [vmem:[%s832 + $0x18] sm:$0xff]
                %841 = vst [vmem:[%s833 + $0x18] sm:$0xff] %v840
                %v842 = vld [vmem:[%s832 + $0x20] sm:$0xff]
                %843 = vst [vmem:[%s833 + $0x20] sm:$0xff] %v842
                %v844 = vld [vmem:[%s832 + $0x28] sm:$0xff]
                %845 = vst [vmem:[%s833 + $0x28] sm:$0xff] %v844
                %v846 = vld [vmem:[%s832 + $0x30] sm:$0xff]
                %847 = vst [vmem:[%s833 + $0x30] sm:$0xff] %v846
                %v848 = vld [vmem:[%s832 + $0x38] sm:$0xff]
                %849 = vst [vmem:[%s833 + $0x38] sm:$0xff] %v848
                %v850 = vld [vmem:[%s832 + $0x40] sm:$0xff]
                %851 = vst [vmem:[%s833 + $0x40] sm:$0xff] %v850
                %v852 = vld [vmem:[%s832 + $0x48] sm:$0xff]
                %853 = vst [vmem:[%s833 + $0x48] sm:$0xff] %v852
                %v854 = vld [vmem:[%s832 + $0x50] sm:$0xff]
                %855 = vst [vmem:[%s833 + $0x50] sm:$0xff] %v854
                %v856 = vld [vmem:[%s832 + $0x58] sm:$0xff]
                %857 = vst [vmem:[%s833 + $0x58] sm:$0xff] %v856
                %v858 = vld [vmem:[%s832 + $0x60] sm:$0xff]
                %859 = vst [vmem:[%s833 + $0x60] sm:$0xff] %v858
                %v860 = vld [vmem:[%s832 + $0x68] sm:$0xff]
                %861 = vst [vmem:[%s833 + $0x68] sm:$0xff] %v860
                %v862 = vld [vmem:[%s832 + $0x70] sm:$0xff]
                %863 = vst [vmem:[%s833 + $0x70] sm:$0xff] %v862
                %v864 = vld [vmem:[%s832 + $0x78] sm:$0xff]
                %865 = vst [vmem:[%s833 + $0x78] sm:$0xff] %v864
                %s866 = sadd.s32 1, %s831
                %p867 = scmp.ge.s32.totalorder %s866, %s824
                %s868 = scalar_select %p867, 0, %s866
                %s869 = smul.u32 %s868, 128
                %s870 = smul.u32 %s868, 128
                %s871 = scalar_lea.vmem %s804, %s869 [#allocation2]
                %s872 = scalar_lea.vmem %s815, %s870
              $region49: #{tpu_custom_call.1} parent=43 // loop_footer
                %s828 = sadd.s32 %s826, 1
              $region50: #{tpu_custom_call.1} parent=43 // loop_footer_branch
                %825 = sbr.rel target = $region46
              $region51: #{tpu_custom_call.1} parent=43 // loop_exit
                _
              %s873 = sshrl.u32 %s811, 4
              %s874 = sand.u32 %s811, 15
              %s875 = smul.u32 %s873, 16
              %s876 = smul.u32 8, %s875
              %s877 = scalar_lea.vmem %s804, %s876 [#allocation2]
              %s878 = smul.u32 8, %s875
              %s879 = scalar_lea.vmem %s815, %s878
              // While loop
              $region52: #{tpu_custom_call.1} parent=43 // loop_pre_header
                _
              $region53: #{tpu_custom_call.1} parent=43 // loop_header
                %s881 = sphi 0, %s883
                %p882 = scmp.ge.s32.totalorder %s881, %s874
                %s886 = sphi 0, %s893
                %s887 = sphi %s877, %s896
                %s888 = sphi %s879, %s897
              $region54: #{tpu_custom_call.1} parent=43 // loop_header_branch
                %885 = sbr.rel (%p882) target = $region58
              $region55: #{tpu_custom_call.1} parent=43 // loop_body
                %v889 = vld [vmem:[%s887] sm:$0xff]
                %890 = vst [vmem:[%s888] sm:$0xff] %v889
                %s891 = sadd.s32 1, %s886
                %p892 = scmp.ge.s32.totalorder %s891, %s874
                %s893 = scalar_select %p892, 0, %s891
                %s894 = smul.u32 %s893, 8
                %s895 = smul.u32 %s893, 8
                %s896 = scalar_lea.vmem %s877, %s894 [#allocation2]
                %s897 = scalar_lea.vmem %s879, %s895
              $region56: #{tpu_custom_call.1} parent=43 // loop_footer
                %s883 = sadd.s32 %s881, 1
              $region57: #{tpu_custom_call.1} parent=43 // loop_footer_branch
                %880 = sbr.rel target = $region53
              $region58: #{tpu_custom_call.1} parent=43 // loop_exit
                _
            $region44: #{tpu_custom_call.1} parent=35 // pred_fallthru
              _
          $region36: #{tpu_custom_call.1} parent=31 // pred_fallthru
            _
          %976 = vnop
        $region32: #{tpu_custom_call.1} parent=27 // pred_fallthru
          _
      $region28: #{tpu_custom_call.1} parent=5 // pred_fallthru
        _
      %p977 = scmp.le.s32.totalorder 2, %s8
      // Predicated region
      $region81: #{tpu_custom_call.1} parent=5 // pred_check
        %p978 = pneg %p977
      $region82: #{tpu_custom_call.1} parent=5 // pred_check_branch
        %980 = sbr.rel (%p978) target = $region84
      $region83: #{tpu_custom_call.1} parent=5 // pred_region
        %s981 = ssub.s32 %s8, 2
        // Predicated region
        $region85: #{tpu_custom_call.1} parent=83 // pred_check
          %p982 = pneg %p89
        $region86: #{tpu_custom_call.1} parent=83 // pred_check_branch
          %984 = sbr.rel (%p982) target = $region88
        $region87: #{tpu_custom_call.1} parent=83 // pred_region
          %s985 = sand.u32 %s74, 1
          %s986 = sand.u32 %s74, 1
          %s987 = smul.addr %s986, 128
          %s988 = scalar_lea.vmem [#allocation2], %s987
        $region88: #{tpu_custom_call.1} parent=83 // pred_fallthru
          _
      $region84: #{tpu_custom_call.1} parent=5 // pred_fallthru
        _
    $region6: #{tpu_custom_call.1} parent=1 // loop_footer
      %s12 = sadd.s32 1, %s8
    $region7: #{tpu_custom_call.1} parent=1 // loop_footer_branch
      %7 = sbr.rel target = $region3
    $region8: #{tpu_custom_call.1} parent=1 // loop_exit
      _

</llo_original>
